<compile_context>
chip_gen: v7x
topology: tpu7x:2x2x1
jax: 0.10.0
libtpu: 0.0.40
codegen_flags: <defaults>
</compile_context>

<pallas_src>
import math
from functools import partial

import jax
import jax.numpy as jnp
from jax.experimental import pallas as pl
from jax.experimental.pallas import tpu as pltpu


# --------------------------------------------------------------------------- #
# Kernel
# --------------------------------------------------------------------------- #
def _pos_encoding_kernel(x_ref, pe_ref, o_ref, *, batch):
    """One grid step: a chunk of sequence positions, lane-dense layout.

    x_ref  : (block_s, B*E)  VMEM
    pe_ref : (block_s, E)    VMEM
    o_ref  : (block_s, B*E)  VMEM
    """
    # Row-major flatten of (B, E) means broadcasting pe over B is exactly
    # tiling pe `batch` times along the lane axis.  The tile + add run on
    # VPU/XLU slots that are idle in this memory-bound kernel.
    o_ref[...] = x_ref[...] + jnp.tile(pe_ref[...], (1, batch))
    # TODO(synk): train-mode dropout (dropout_p > 0) would use pltpu.prng_seed
    # + pltpu.stateful_bernoulli here; eval / p = 0.0 is identity.


# --------------------------------------------------------------------------- #
# Buffer construction (mirrors the PyTorch __init__)
# --------------------------------------------------------------------------- #
def make_pos_encoding(max_len, enc_features, dtype=jnp.float32):
    """Builds the buffer exactly like the PyTorch __init__ (shape (L, 1, E))."""
    positions = jnp.arange(max_len, dtype=jnp.float32)[:, None]             # (L, 1)
    division_term = jnp.exp(
        jnp.arange(0, enc_features, 2, dtype=jnp.float32)
        * (-math.log(100000.0) / enc_features))                            # (ceil(E/2),)
    angles = positions * division_term                                      # (L, ceil(E/2))
    pe = jnp.zeros((max_len, enc_features), dtype=jnp.float32)
    pe = pe.at[:, 0::2].set(jnp.sin(angles))
    pe = pe.at[:, 1::2].set(jnp.cos(angles)[:, : enc_features // 2])
    return pe[:, None, :].astype(dtype)                                     # (L, 1, E)


# --------------------------------------------------------------------------- #
# Wrapper
# --------------------------------------------------------------------------- #
def positional_encoding_forward(x, pos_encoding, *, target_block_bytes=2 << 20):
    """x: (S, B, E); pos_encoding: (max_len, 1, E) -> (S, B, E)."""
    S, B, E = x.shape

    # Match pe dtype to x so the pe DMA stream is as narrow as x's and the add
    # does not upcast/recast.
    pe = pos_encoding[:S, 0, :].astype(x.dtype)                             # (S, E)

    # Lane-dense view of x / out.
    x_flat = x.reshape(S, B * E)
    row_bytes = B * E * x_flat.dtype.itemsize

    # Fixed-byte block target: ~2 MiB per x/out block (pe block is B x smaller).
    # Double-buffered x + pe + out then totals ~8-9 MiB of VMEM, safe on every
    # generation without raising vmem_limit_bytes.
    if S * row_bytes <= target_block_bytes:
        block_s = S                                   # single step (toy sizes)
    else:
        block_s = max(8, (target_block_bytes // row_bytes) // 8 * 8)
        block_s = min(block_s, S)
    grid = (pl.cdiv(S, block_s),)                     # partial last block is masked

    out_flat = pl.pallas_call(
        partial(_pos_encoding_kernel, batch=B),
        out_shape=jax.ShapeDtypeStruct((S, B * E), x.dtype),
        grid_spec=pltpu.PrefetchScalarGridSpec(
            num_scalar_prefetch=0,
            grid=grid,
            in_specs=[
                pl.BlockSpec((block_s, B * E), lambda i: (i, 0)),   # x (lane-dense)
                pl.BlockSpec((block_s, E), lambda i: (i, 0)),       # pe
            ],
            out_specs=pl.BlockSpec((block_s, B * E), lambda i: (i, 0)),
        ),
        compiler_params=pltpu.CompilerParams(
            dimension_semantics=("parallel",)),       # megacore-shards on v7x
        # NOTE: input_output_aliases={0: 0} would let out reuse x's HBM slab,
        # but only when the caller provably drops x; omitted here since the
        # self-test (and typical callers) keep x alive.
    )(x_flat, pe)

    return out_flat.reshape(S, B, E)


def positional_encoding_reference(x, pos_encoding):
    """Pure-JAX reference mirroring the PyTorch forward (dropout = identity)."""
    S = x.shape[0]
    return x + pos_encoding[:S].astype(x.dtype)


# --------------------------------------------------------------------------- #
# Self-test
# --------------------------------------------------------------------------- #
if __name__ == "__main__":
    key = jax.random.PRNGKey(0)

    # 1) Small shapes consistent with the module: seq=8, batch=2, E=64
    #    (B*E = 128 -> one full lane-dense vreg row).
    S, B, E = 8, 2, 64
    max_len = 16
    x = jax.random.normal(key, (S, B, E), dtype=jnp.float32)
    pos_encoding = make_pos_encoding(max_len, E)                 # (max_len, 1, E)

    out = positional_encoding_forward(x, pos_encoding)
    out = jax.block_until_ready(out)
    ref = positional_encoding_reference(x, pos_encoding)
    assert out.shape == (S, B, E)
    assert jnp.allclose(out, ref, atol=1e-6, rtol=1e-6), "mismatch vs reference (toy)"

    # 2) Exercise the multi-block path with a partial (masked) last block by
    #    shrinking the per-block byte target.
    S2 = 40
    max_len2 = 64
    x2 = jax.random.normal(jax.random.PRNGKey(1), (S2, B, E), dtype=jnp.float32)
    pe2 = make_pos_encoding(max_len2, E)
    out2 = positional_encoding_forward(x2, pe2, target_block_bytes=8 << 10)
    out2 = jax.block_until_ready(out2)
    ref2 = positional_encoding_reference(x2, pe2)
    assert jnp.allclose(out2, ref2, atol=1e-6, rtol=1e-6), "mismatch vs reference (tiled)"

    print("KERNEL_OK")
</pallas_src>

<mosaic_0001>
module attributes {stable_mosaic.version = 11 : i64} {
  func.func @_pos_encoding_kernel(%arg0: i32, %arg1: memref<8x128xf32, #tpu.memory_space<vmem>>, %arg2: memref<8x64xf32, #tpu.memory_space<vmem>>, %arg3: memref<8x128xf32, #tpu.memory_space<vmem>>) attributes {dimension_semantics = [#tpu.dimension_semantics<parallel>], iteration_bounds = array<i64: 1>, scalar_prefetch = 0 : i64, scratch_operands = 0 : i64, tpu.core_type = #tpu.core_type<tc>, window_params = [{transform_indices = @transform_0, window_bounds = array<i64: 8, 128>}, {transform_indices = @transform_1, window_bounds = array<i64: 8, 64>}, {transform_indices = @transform_2, window_bounds = array<i64: 8, 128>}]} {
    %c0 = arith.constant 0 : index
    %c0_0 = arith.constant 0 : index
    %0 = vector.load %arg1[%c0, %c0_0] : memref<8x128xf32, #tpu.memory_space<vmem>>, vector<8x128xf32>
    %c0_1 = arith.constant 0 : index
    %c0_2 = arith.constant 0 : index
    %1 = vector.load %arg2[%c0_1, %c0_2] : memref<8x64xf32, #tpu.memory_space<vmem>>, vector<8x64xf32>
    %2 = tpu.concatenate %1, %1 in 1 : vector<8x64xf32>, vector<8x64xf32> -> vector<8x128xf32>
    %3 = arith.addf %0, %2 : vector<8x128xf32>
    %c0_3 = arith.constant 0 : index
    %c0_4 = arith.constant 0 : index
    %4 = vector.load %arg3[%c0_3, %c0_4] : memref<8x128xf32, #tpu.memory_space<vmem>>, vector<8x128xf32>
    tpu.vector_store %arg3[%c0_3, %c0_4], %3 {strides = array<i32>} : memref<8x128xf32, #tpu.memory_space<vmem>>, vector<8x128xf32>,
    return
  }
  func.func @transform_0(%arg0: i32) -> (i32, i32) {
    %c0_i32 = arith.constant 0 : i32
    %c0_i32_0 = arith.constant 0 : i32
    return %arg0, %c0_i32 : i32, i32
  }
  func.func @transform_1(%arg0: i32) -> (i32, i32) {
    %c0_i32 = arith.constant 0 : i32
    %c0_i32_0 = arith.constant 0 : i32
    return %arg0, %c0_i32 : i32, i32
  }
  func.func @transform_2(%arg0: i32) -> (i32, i32) {
    %c0_i32 = arith.constant 0 : i32
    %c0_i32_0 = arith.constant 0 : i32
    return %arg0, %c0_i32 : i32, i32
  }
}

</mosaic_0001>

<llo_original>
// kernel: tpu_custom_call.1
$region0: #{tpu_custom_call.1}
  #allocation0 [shape = 'u32[]', space=smem, size = 0x4, offset = 0x4, fixed_abs, tag = 'smem constant byte address 0x4 - core index']
  #allocation1 [shape = 'u32[144,128]{1,0:T(1,128)}', space=vmem, size = 0x12000, scoped, tag = 'internal scratch']
  %s0 = inlined_call_operand.hbm [shape: f32[8,128], index: 0, kind: input, shape index: {}]
  %s1 = inlined_call_operand.hbm [shape: f32[8,64], index: 1, kind: input, shape index: {}]
  %s2 = inlined_call_operand.hbm [shape: f32[8,128], index: 2, kind: output, shape index: {}]
  %s3 = sld [smem:[#allocation0]]
  $region26: #{tpu_custom_call.1} parent=0
    _
  %s5 = ssub.s32 1, %s3
  %s6 = scalar_select 0, %s5, %s3
  $region1: #{tpu_custom_call.1} parent=0
    #allocation2 [shape = 'u8[4096]{0}', space=vmem, size = 0x1000, scoped, tag = 'input window, operand 0, single buffered']
    #allocation3 [shape = 's32[1]{0}', space=sflag, size = 0x4, scoped, tag = 'scoped memory for tpu_custom_call.1']
    #allocation4 [shape = 's32[1]{0}', space=sflag, size = 0x4, scoped, tag = 'scoped memory for tpu_custom_call.1']
    #allocation5 [shape = 'u8[4096]{0}', space=vmem, size = 0x1000, scoped, tag = 'input window, operand 1, single buffered']
    #allocation6 [shape = 's32[1]{0}', space=sflag, size = 0x4, scoped, tag = 'scoped memory for tpu_custom_call.1']
    #allocation7 [shape = 'u8[4096]{0}', space=vmem, size = 0x1000, scoped, tag = 'output window, operand 0, single buffered']
    %7 = vsyncpa [#allocation3], 0
    %8 = vsyncpa [#allocation6], 0
    %9 = vsyncpa [#allocation4], 0
    // Predicated region
    $region2: #{tpu_custom_call.1} parent=1 // pred_check
      _
    $region3: #{tpu_custom_call.1} parent=1 // pred_check_branch
      %11 = sbr.rel (0) target = $region5
    $region4: #{tpu_custom_call.1} parent=1 // pred_region
      %s13 = ssub.s32 128, 128
      %14 = vsyncadd [#allocation3], %s13
      %s16 = sshll.u32 [#allocation2], 4
      %s17 = int_to_ptr.vmem [resolvable:$true] %s16
      %19 = dma.hbm_to_vmem [thread:$0]  %s0, 128, %s17, [#allocation3]
    $region5: #{tpu_custom_call.1} parent=1 // pred_fallthru
      _
    // Predicated region
    $region6: #{tpu_custom_call.1} parent=1 // pred_check
      _
    $region7: #{tpu_custom_call.1} parent=1 // pred_check_branch
      %21 = sbr.rel (0) target = $region9
    $region8: #{tpu_custom_call.1} parent=1 // pred_region
      %s23 = ssub.s32 128, 128
      %24 = vsyncadd [#allocation6], %s23
      %s26 = sshll.u32 [#allocation5], 4
      %s27 = int_to_ptr.vmem [resolvable:$true] %s26
      %29 = dma.hbm_to_vmem [thread:$0]  %s1, 128, %s27, [#allocation6]
    $region9: #{tpu_custom_call.1} parent=1 // pred_fallthru
      _
    // Predicated region
    $region10: #{tpu_custom_call.1} parent=1 // pred_check
      _
    $region11: #{tpu_custom_call.1} parent=1 // pred_check_branch
      %31 = sbr.rel (0) target = $region13
    $region12: #{tpu_custom_call.1} parent=1 // pred_region
      %32 = dma.done [#allocation3], 128
    $region13: #{tpu_custom_call.1} parent=1 // pred_fallthru
      _
    // Predicated region
    $region14: #{tpu_custom_call.1} parent=1 // pred_check
      _
    $region15: #{tpu_custom_call.1} parent=1 // pred_check_branch
      %34 = sbr.rel (0) target = $region17
    $region16: #{tpu_custom_call.1} parent=1 // pred_region
      %35 = dma.done [#allocation6], 128
    $region17: #{tpu_custom_call.1} parent=1 // pred_fallthru
      _
    %v36 = vld [vmem:[#allocation2] sm:$0xff]
    %v37 = vld [vmem:[#allocation5] sm:$0xff]
    %39 = vrot.lane.b32.xlu0 %v37, 64
    %v40 = vpop.permute.xlu0 %39
    %vm42 = vcmask 523264
    %v43 = vsel %vm42, %v37, %v40
    %v44 = vadd.f32 %v36, %v43
    %45 = vst [vmem:[#allocation7] sm:$0xff] %v44
    // Predicated region
    $region18: #{tpu_custom_call.1} parent=1 // pred_check
      _
    $region19: #{tpu_custom_call.1} parent=1 // pred_check_branch
      %47 = sbr.rel (0) target = $region21
    $region20: #{tpu_custom_call.1} parent=1 // pred_region
      %s49 = ssub.s32 128, 128
      %50 = vsyncadd [#allocation4], %s49
      %s52 = sshll.u32 [#allocation7], 4
      %s53 = int_to_ptr.vmem [resolvable:$true] %s52
      %55 = dma.vmem_to_hbm [thread:$0]  %s53, 128, %s2, [#allocation4]
    $region21: #{tpu_custom_call.1} parent=1 // pred_fallthru
      _
    // Predicated region
    $region22: #{tpu_custom_call.1} parent=1 // pred_check
      _
    $region23: #{tpu_custom_call.1} parent=1 // pred_check_branch
      %57 = sbr.rel (0) target = $region25
    $region24: #{tpu_custom_call.1} parent=1 // pred_region
      %58 = dma.done [#allocation4], 128
    $region25: #{tpu_custom_call.1} parent=1 // pred_fallthru
      _
    %59 = vsyncpa [#allocation3], 1
    %60 = vsyncpa [#allocation6], 1
    %61 = vsyncpa [#allocation4], 1

</llo_original>
